<compile_context>
chip_gen: v6e
topology: v6e:2x2x1
jax: 0.10.0
libtpu: 0.0.40
codegen_flags: <defaults>
</compile_context>

<pallas_src>
import math

import jax
import jax.numpy as jnp
from jax.experimental import pallas as pl
from jax.experimental.pallas import tpu as pltpu

_NEG_SLOPE = 0.2
_GAIN = math.sqrt(2.0)


def _lambda_kernel(x_ref, o_ref):
    # Elementwise: leaky_relu(x, 0.2) * sqrt(2)   (the wrapped `fn`)
    x = x_ref[...]
    o_ref[...] = jnp.where(x >= 0, x, x * _NEG_SLOPE) * jnp.asarray(_GAIN, x.dtype)


def _choose_row_tile(rows: int, lanes: int, itemsize: int, sub: int,
                     target_block_bytes: int) -> int:
    """Pick the block row count: ~target_block_bytes per block, multiple of the
    packed-sublane granularity, and small enough to leave >= 2 grid steps."""
    if rows <= sub:
        # Block row dim == full array rows (always a legal block shape).
        return rows
    rt = target_block_bytes // (lanes * itemsize)
    rt = max(sub, (rt // sub) * sub)
    # Keep at least two grid iterations so v7x can shard across its 2 TCs.
    half = max(sub, (((rows + 1) // 2) // sub) * sub)
    rt = min(rt, half)
    return max(sub, rt)


def _run_slab(slab: jax.Array, rt: int) -> jax.Array:
    rows, lanes = slab.shape
    grid = (pl.cdiv(rows, rt),)
    return pl.pallas_call(
        _lambda_kernel,
        out_shape=jax.ShapeDtypeStruct((rows, lanes), slab.dtype),
        grid_spec=pltpu.PrefetchScalarGridSpec(
            num_scalar_prefetch=0,
            grid=grid,
            in_specs=[pl.BlockSpec((rt, lanes), lambda i: (i, 0))],
            out_specs=pl.BlockSpec((rt, lanes), lambda i: (i, 0)),
        ),
        compiler_params=pltpu.CompilerParams(
            dimension_semantics=("parallel",),
        ),
    )(slab)


def lambda_forward(x: jax.Array, *, target_block_bytes: int = 2 * 1024 * 1024,
                   max_lane_width: int = 1024) -> jax.Array:
    """Apply fn(x) = leaky_relu(x, 0.2) * sqrt(2) via a Pallas TPU kernel.

    x: any-shape array (NCHW in StyleGAN2). Returns same shape/dtype.
    """
    orig_shape = x.shape
    dtype = x.dtype
    total = x.size
    itemsize = jnp.dtype(dtype).itemsize
    # Packed-sublane granularity: 8 rows for 4-byte, 16 for 2-byte, 32 for 1-byte.
    sub = max(8, 32 // itemsize)

    # Lane width: largest multiple of 128 (<= max_lane_width) dividing `total`.
    lanes = 0
    cand = (max_lane_width // 128) * 128
    while cand >= 128:
        if total % cand == 0:
            lanes = cand
            break
        cand -= 128

    if lanes:
        # Common path: zero-copy reshape, no padding, no trailing slice.
        rows = total // lanes
        slab = x.reshape(rows, lanes)
        rt = _choose_row_tile(rows, lanes, itemsize, sub, target_block_bytes)
        out = _run_slab(slab, rt)
        return out.reshape(orig_shape)

    # Fallback (total not a multiple of 128): one pad + one slice.
    lanes = 128
    rows = pl.cdiv(total, lanes)
    pad = rows * lanes - total
    flat = jnp.pad(x.reshape(-1), (0, pad))
    slab = flat.reshape(rows, lanes)
    rt = _choose_row_tile(rows, lanes, itemsize, sub, target_block_bytes)
    out = _run_slab(slab, rt)
    return out.reshape(-1)[:total].reshape(orig_shape)


def _reference(x: jax.Array) -> jax.Array:
    return jnp.where(x >= 0, x, x * _NEG_SLOPE) * jnp.asarray(_GAIN, x.dtype)


if __name__ == "__main__":
    key = jax.random.PRNGKey(0)

    # Primary test: NCHW, batch=2, channels=4, spatial=16 (2048 elems, 128-aligned).
    x = jax.random.normal(key, (2, 4, 16, 16), dtype=jnp.float32)
    y = jax.block_until_ready(lambda_forward(x))
    assert y.shape == x.shape and y.dtype == x.dtype
    assert jnp.allclose(y, _reference(x), atol=1e-6, rtol=1e-6)

    # Ragged-row path: rows not a multiple of the row tile (partial last block).
    x2 = jax.random.normal(jax.random.PRNGKey(1), (2, 4, 72, 128), dtype=jnp.float32)
    y2 = jax.block_until_ready(lambda_forward(x2))
    assert jnp.allclose(y2, _reference(x2), atol=1e-6, rtol=1e-6)

    # Fallback path: element count not a multiple of 128.
    x3 = jax.random.normal(jax.random.PRNGKey(2), (3, 5, 7, 9), dtype=jnp.float32)
    y3 = jax.block_until_ready(lambda_forward(x3))
    assert jnp.allclose(y3, _reference(x3), atol=1e-6, rtol=1e-6)

    print("KERNEL_OK")
</pallas_src>

<mosaic_0001>
module attributes {stable_mosaic.version = 11 : i64} {
  func.func @_lambda_kernel(%arg0: i32, %arg1: memref<2x1024xf32, #tpu.memory_space<vmem>>, %arg2: memref<2x1024xf32, #tpu.memory_space<vmem>>) attributes {dimension_semantics = [#tpu.dimension_semantics<parallel>], iteration_bounds = array<i64: 1>, scalar_prefetch = 0 : i64, scratch_operands = 0 : i64, tpu.core_type = #tpu.core_type<tc>, window_params = [{transform_indices = @transform_0, window_bounds = array<i64: 2, 1024>}, {transform_indices = @transform_1, window_bounds = array<i64: 2, 1024>}]} {
    %c0 = arith.constant 0 : index
    %c0_0 = arith.constant 0 : index
    %0 = vector.load %arg1[%c0, %c0_0] : memref<2x1024xf32, #tpu.memory_space<vmem>>, vector<2x1024xf32>
    %cst = arith.constant 0.000000e+00 : f32
    %1 = vector.broadcast %cst : f32 to vector<2x1024xf32>
    %2 = arith.cmpf oge, %0, %1 : vector<2x1024xf32>
    %cst_1 = arith.constant 2.000000e-01 : f32
    %3 = vector.broadcast %cst_1 : f32 to vector<2x1024xf32>
    %4 = arith.mulf %0, %3 : vector<2x1024xf32>
    %5 = arith.select %2, %0, %4 : vector<2x1024xi1>, vector<2x1024xf32>
    %cst_2 = arith.constant 1.41421354 : f32
    %6 = vector.broadcast %cst_2 : f32 to vector<2x1024xf32>
    %7 = arith.mulf %5, %6 : vector<2x1024xf32>
    %c0_3 = arith.constant 0 : index
    %c0_4 = arith.constant 0 : index
    %8 = vector.load %arg2[%c0_3, %c0_4] : memref<2x1024xf32, #tpu.memory_space<vmem>>, vector<2x1024xf32>
    tpu.vector_store %arg2[%c0_3, %c0_4], %7 {strides = array<i32>} : memref<2x1024xf32, #tpu.memory_space<vmem>>, vector<2x1024xf32>,
    return
  }
  func.func @transform_0(%arg0: i32) -> (i32, i32) {
    %c0_i32 = arith.constant 0 : i32
    %c0_i32_0 = arith.constant 0 : i32
    return %arg0, %c0_i32 : i32, i32
  }
  func.func @transform_1(%arg0: i32) -> (i32, i32) {
    %c0_i32 = arith.constant 0 : i32
    %c0_i32_0 = arith.constant 0 : i32
    return %arg0, %c0_i32 : i32, i32
  }
}

</mosaic_0001>

<llo_original>
// kernel: tpu_custom_call.1
$region0: #{tpu_custom_call.1}
  #allocation0 [shape = 'u32[]', space=smem, size = 0x4, offset = 0x4, fixed_abs, tag = 'smem constant byte address 0x4 - core index']
  #allocation1 [shape = 'u32[144,128]{1,0:T(1,128)}', space=vmem, size = 0x12000, scoped, tag = 'internal scratch']
  %s0 = inlined_call_operand.hbm [shape: f32[2,1024], index: 0, kind: input, shape index: {}]
  %s1 = inlined_call_operand.hbm [shape: f32[2,1024], index: 1, kind: output, shape index: {}]
  %s2 = sld [smem:[#allocation0]]
  $region18: #{tpu_custom_call.1} parent=0
    _
  %s4 = ssub.s32 1, %s2
  %s5 = scalar_select 0, %s4, %s2
  $region1: #{tpu_custom_call.1} parent=0
    #allocation2 [shape = 'u8[8192]{0}', space=vmem, size = 0x2000, scoped, tag = 'input window, operand 0, single buffered']
    #allocation3 [shape = 's32[1]{0}', space=sflag, size = 0x4, scoped, tag = 'scoped memory for tpu_custom_call.1']
    #allocation4 [shape = 's32[1]{0}', space=sflag, size = 0x4, scoped, tag = 'scoped memory for tpu_custom_call.1']
    #allocation5 [shape = 'u8[8192]{0}', space=vmem, size = 0x2000, scoped, tag = 'output window, operand 0, single buffered']
    %6 = vsyncpa [#allocation3], 0
    %7 = vsyncpa [#allocation4], 0
    // Predicated region
    $region2: #{tpu_custom_call.1} parent=1 // pred_check
      _
    $region3: #{tpu_custom_call.1} parent=1 // pred_check_branch
      %9 = sbr.rel (0) target = $region5
    $region4: #{tpu_custom_call.1} parent=1 // pred_region
      %s11 = ssub.s32 256, 256
      %12 = vsyncadd [#allocation3], %s11
      %s14 = sshll.u32 [#allocation2], 4
      %s15 = int_to_ptr.vmem [resolvable:$true] %s14
      %17 = dma.hbm_to_vmem [thread:$0]  %s0, 256, %s15, [#allocation3]
    $region5: #{tpu_custom_call.1} parent=1 // pred_fallthru
      _
    // Predicated region
    $region6: #{tpu_custom_call.1} parent=1 // pred_check
      _
    $region7: #{tpu_custom_call.1} parent=1 // pred_check_branch
      %19 = sbr.rel (0) target = $region9
    $region8: #{tpu_custom_call.1} parent=1 // pred_region
      %20 = dma.done [#allocation3], 256
    $region9: #{tpu_custom_call.1} parent=1 // pred_fallthru
      _
    %v21 = vld [vmem:[#allocation2] sm:$0xff]
    %v22 = vld [vmem:[#allocation2 + $0x8] sm:$0xff]
    %vm23 = vcmp.ge.f32.partialorder %v21, 0.0
    %vm24 = vcmp.ge.f32.partialorder %v22, 0.0
    %v25 = vmul.f32 %v21, 0.2
    %v26 = vmul.f32 %v22, 0.2
    %v27 = vsel %vm23, %v21, %v25
    %v28 = vsel %vm24, %v22, %v26
    %v29 = vmul.f32 %v27, 1.4142135
    %v30 = vmul.f32 %v28, 1.4142135
    %31 = vst [vmem:[#allocation5] sm:$0xff] %v29
    %32 = vst [vmem:[#allocation5 + $0x8] sm:$0xff] %v30
    // Predicated region
    $region10: #{tpu_custom_call.1} parent=1 // pred_check
      _
    $region11: #{tpu_custom_call.1} parent=1 // pred_check_branch
      %34 = sbr.rel (0) target = $region13
    $region12: #{tpu_custom_call.1} parent=1 // pred_region
      %s36 = ssub.s32 256, 256
      %37 = vsyncadd [#allocation4], %s36
      %s39 = sshll.u32 [#allocation5], 4
      %s40 = int_to_ptr.vmem [resolvable:$true] %s39
      %42 = dma.vmem_to_hbm [thread:$0]  %s40, 256, %s1, [#allocation4]
    $region13: #{tpu_custom_call.1} parent=1 // pred_fallthru
      _
    // Predicated region
    $region14: #{tpu_custom_call.1} parent=1 // pred_check
      _
    $region15: #{tpu_custom_call.1} parent=1 // pred_check_branch
      %44 = sbr.rel (0) target = $region17
    $region16: #{tpu_custom_call.1} parent=1 // pred_region
      %45 = dma.done [#allocation4], 256
    $region17: #{tpu_custom_call.1} parent=1 // pred_fallthru
      _
    %46 = vsyncpa [#allocation3], 1
    %47 = vsyncpa [#allocation4], 1

</llo_original>
